<compile_context>
chip_gen: v7x
topology: tpu7x:2x2x1
jax: 0.10.0
libtpu: 0.0.40
codegen_flags: <defaults>
</compile_context>

<pallas_src>
import functools

import jax
import jax.numpy as jnp
from jax.experimental import pallas as pl
from jax.experimental.pallas import tpu as pltpu

EPS = 1e-5      # BatchNorm1d eps
LANE = 128
SUB = 8
_VMEM_LIMIT = 48 * 1024 * 1024   # <= v7x 64 MiB physical VMEM; fine on v5e/v6e

_VMEM = pl.BlockSpec(memory_space=pltpu.MemorySpace.VMEM)
_SMEM = pl.BlockSpec(memory_space=pltpu.MemorySpace.SMEM)


def _round_up(x, m):
    return ((x + m - 1) // m) * m


def _pick_tile(dim, prefer):
    """Largest multiple of 128 <= prefer that divides dim (dim is a 128-multiple)."""
    t = min(prefer, dim)
    t -= t % LANE
    while dim % t:
        t -= LANE
    return t


# ----------------------------- Pallas kernels ------------------------------

def gaussian_edge_kernel(inv_sigma_ref, d_ref, o_ref):
    # d_ref: [8, E_pad] (first D rows are pos[src]-pos[dst], rest zero).
    # Lane-dense output [1, E_pad]; the sublane reduce goes to the XLU.
    d = d_ref[...]
    sq = jnp.sum(d * d, axis=0, keepdims=True)
    o_ref[...] = jnp.exp(-inv_sigma_ref[0, 0] * sq)


def xw_kernel(fuse_bn, *refs):
    # t = [relu(x*scale + shift)] @ W.  1-D grid over row tiles, W resident.
    # The optional BN prologue fuses the previous conv's BatchNorm + ReLU into
    # this matmul (pure VPU filler under the MXU/DMA work).
    if fuse_bn:
        x_ref, scale_ref, shift_ref, w_ref, o_ref = refs
        x = x_ref[...].astype(jnp.float32) * scale_ref[...] + shift_ref[...]
        x = jnp.maximum(x, 0.0).astype(jnp.bfloat16)
    else:
        x_ref, w_ref, o_ref = refs
        x = x_ref[...]
    o_ref[...] = jnp.dot(x, w_ref[...],
                         preferred_element_type=jnp.float32).astype(o_ref.dtype)


def propagate_kernel(n_real, tm, cols_ref, nb_ref, a_ref, t_ref, b_ref,
                     y_ref, stats_ref, acc_ref):
    # Y = A_norm @ T + b over the block-sparse structure of A, plus masked
    # per-row-tile partial BN statistics (sum / sum-of-squares in f32).
    # NOTE: all program_id / num_programs binds stay at the top level; only
    # their values are used inside pl.when bodies.
    i = pl.program_id(0)
    s = pl.program_id(1)
    last = pl.num_programs(1) - 1
    nblk = nb_ref[i]                       # number of real (nonzero) blocks
    row_base = i * tm

    @pl.when(s == 0)
    def _():
        acc_ref[...] = jnp.zeros_like(acc_ref)

    @pl.when(s < nblk)                     # skip padded (all-zero) blocks
    def _():
        acc_ref[...] += jnp.dot(a_ref[...], t_ref[...],
                                preferred_element_type=jnp.float32)

    @pl.when(s == last)
    def _():
        y = acc_ref[...] + b_ref[...]                     # f32
        y_ref[...] = y.astype(y_ref.dtype)                # bf16 out
        h = y.shape[1]
        row = jax.lax.broadcasted_iota(jnp.int32, (tm, 1), 0) + row_base
        mask = (row < n_real).astype(jnp.float32)         # exclude padded nodes
        ym = y * mask
        ssum = jnp.sum(ym, axis=0, keepdims=True)         # [1, H]
        ssq = jnp.sum(ym * y, axis=0, keepdims=True)      # [1, H]
        stats = jnp.concatenate(
            [ssum, ssq, jnp.zeros((SUB - 2, h), jnp.float32)], axis=0)
        stats_ref[...] = stats[None]


def bn_act_kernel(add_residual, *refs):
    # h = relu(y*scale + shift (+ residual)) -- block output for non-final blocks.
    if add_residual:
        x_ref, scale_ref, shift_ref, res_ref, o_ref = refs
    else:
        x_ref, scale_ref, shift_ref, o_ref = refs
    y = x_ref[...].astype(jnp.float32) * scale_ref[...] + shift_ref[...]
    if add_residual:
        y = y + res_ref[...].astype(jnp.float32)
    o_ref[...] = jnp.maximum(y, 0.0).astype(o_ref.dtype)


def bn_act_pool_kernel(add_residual, *refs):
    # Final block: h = relu(y*scale + shift (+ residual)); pooled += P_blk @ h.
    # h itself is never written to HBM; only the tiny pooled sums come out.
    if add_residual:
        x_ref, scale_ref, shift_ref, res_ref, p_ref, pooled_ref, acc_ref = refs
    else:
        x_ref, scale_ref, shift_ref, p_ref, pooled_ref, acc_ref = refs
    i = pl.program_id(0)
    last = pl.num_programs(0) - 1

    y = x_ref[...].astype(jnp.float32) * scale_ref[...] + shift_ref[...]
    if add_residual:
        y = y + res_ref[...].astype(jnp.float32)
    h = jnp.maximum(y, 0.0)

    @pl.when(i == 0)
    def _():
        acc_ref[...] = jnp.zeros_like(acc_ref)

    acc_ref[...] += jnp.dot(p_ref[...], h, preferred_element_type=jnp.float32)

    @pl.when(i == last)
    def _():
        pooled_ref[...] = acc_ref[...]


def mlp_kernel(num_layers, x_ref, *refs):
    # Tiny linear head on the pooled [B_pad, H] tensor; everything resident.
    out_ref = refs[2 * num_layers]
    h = x_ref[...]
    for l in range(num_layers):
        w_ref = refs[2 * l]
        b_ref = refs[2 * l + 1]
        h = jnp.dot(h.astype(jnp.bfloat16), w_ref[...],
                    preferred_element_type=jnp.float32) + b_ref[...]
        if l != num_layers - 1:
            h = jnp.maximum(h, 0.0)
    out_ref[...] = h.astype(out_ref.dtype)


# ------------------------------ wrappers ------------------------------------

def gaussian_edge_weights(inv_sigma, edge_index, pos):
    diff = pos[edge_index[0]] - pos[edge_index[1]]          # gather (glue) [E, D]
    e, d = diff.shape
    e_pad = _round_up(e, LANE)
    dmat = jnp.zeros((SUB, e_pad), jnp.float32).at[:d, :e].set(diff.T)
    out = pl.pallas_call(
        gaussian_edge_kernel,
        out_shape=jax.ShapeDtypeStruct((1, e_pad), jnp.float32),
        in_specs=[_SMEM, _VMEM],
        out_specs=_VMEM,
    )(inv_sigma.reshape(1, 1).astype(jnp.float32), dmat)
    return out[0, :e]                                       # [num_edges]


def normalized_adjacency(edge_index, edge_weight, num_nodes):
    # PyG gcn_norm (self-loop weight 1) materialized as a dense normalized
    # adjacency (glue); the message-passing matmuls run block-sparse in Pallas.
    src, dst = edge_index[0], edge_index[1]
    a = jnp.zeros((num_nodes, num_nodes), jnp.float32).at[dst, src].add(edge_weight)
    a = a + jnp.eye(num_nodes, dtype=jnp.float32)
    deg = a.sum(axis=1)
    dinv = jnp.where(deg > 0, jax.lax.rsqrt(deg), 0.0)
    return dinv[:, None] * a * dinv[None, :]


def _block_structure(a_pad, tm, tk):
    """Per-row-tile list of nonzero [tm,tk] column blocks (+ counts)."""
    m = a_pad.shape[0]
    nbr, nbc = m // tm, m // tk
    blk = jnp.abs(a_pad).reshape(nbr, tm, nbc, tk).sum(axis=(1, 3)) > 0   # [nbr,nbc]
    counts = blk.sum(axis=1).astype(jnp.int32)                            # [nbr]
    max_blocks = max(int(jnp.max(counts)), 1)    # concrete (eager glue, not jitted)
    order = jnp.argsort(jnp.logical_not(blk).astype(jnp.int32),
                        axis=1, stable=True).astype(jnp.int32)
    cols = order[:, :max_blocks]                                          # [nbr,MB]
    sidx = jnp.arange(max_blocks, dtype=jnp.int32)[None, :]
    last_valid = jnp.take_along_axis(cols, jnp.maximum(counts - 1, 0)[:, None],
                                     axis=1)
    # Pad by repeating the last valid block index -> the pipeline sees an
    # unchanged block index on padded steps and skips the redundant DMA.
    cols = jnp.where(sidx < counts[:, None], cols, last_valid)
    return cols.reshape(-1), counts, max_blocks


def _xw(x, w, scale=None, shift=None):
    # t = [relu(x*scale+shift)] @ W ; 1-D row grid, W fully resident in VMEM.
    m, k = x.shape
    n = w.shape[1]
    tm = _pick_tile(m, 512)
    fuse_bn = scale is not None
    kern = functools.partial(xw_kernel, fuse_bn)
    arrays = [x]
    in_specs = [pl.BlockSpec((tm, k), lambda i: (i, 0))]
    if fuse_bn:
        arrays += [scale.astype(jnp.float32), shift.astype(jnp.float32)]
        in_specs += [pl.BlockSpec((1, k), lambda i: (0, 0)),
                     pl.BlockSpec((1, k), lambda i: (0, 0))]
    arrays.append(w.astype(jnp.bfloat16))
    in_specs.append(pl.BlockSpec((k, n), lambda i: (0, 0)))
    return pl.pallas_call(
        kern,
        out_shape=jax.ShapeDtypeStruct((m, n), jnp.bfloat16),
        grid_spec=pltpu.PrefetchScalarGridSpec(
            num_scalar_prefetch=0,
            grid=(m // tm,),
            in_specs=in_specs,
            out_specs=pl.BlockSpec((tm, n), lambda i: (i, 0))),
        compiler_params=pltpu.CompilerParams(
            dimension_semantics=("parallel",),
            vmem_limit_bytes=_VMEM_LIMIT),
    )(*arrays)


def _propagate(a_bf, t, b, n_real, blk_cols, blk_counts, max_blocks, tm, tk):
    m = a_bf.shape[0]
    h = t.shape[1]
    n_row_tiles = m // tm
    mb = max_blocks
    kern = functools.partial(propagate_kernel, n_real, tm)
    cost = pl.CostEstimate(
        flops=2 * n_row_tiles * mb * tm * tk * h,
        transcendentals=0,
        bytes_accessed=(n_row_tiles * mb * (tm * tk + tk * h) * 2
                        + m * h * 2 + n_row_tiles * SUB * h * 4))
    y, stats = pl.pallas_call(
        kern,
        out_shape=(jax.ShapeDtypeStruct((m, h), jnp.bfloat16),
                   jax.ShapeDtypeStruct((n_row_tiles, SUB, h), jnp.float32)),
        grid_spec=pltpu.PrefetchScalarGridSpec(
            num_scalar_prefetch=2,                 # (block cols, block counts)
            grid=(n_row_tiles, mb),
            in_specs=[
                # A: only the nonzero [tm,tk] blocks of this row tile.
                pl.BlockSpec((tm, tk),
                             lambda i, s, cols, nb: (i, cols[i * mb + s])),
                # T: the matching [tk,H] block (no full re-stream per row tile).
                pl.BlockSpec((tk, h),
                             lambda i, s, cols, nb: (cols[i * mb + s], 0)),
                pl.BlockSpec((1, h), lambda i, s, cols, nb: (0, 0)),
            ],
            out_specs=(pl.BlockSpec((tm, h), lambda i, s, cols, nb: (i, 0)),
                       pl.BlockSpec((1, SUB, h),
                                    lambda i, s, cols, nb: (i, 0, 0))),
            scratch_shapes=[pltpu.VMEM((tm, h), jnp.float32)]),
        compiler_params=pltpu.CompilerParams(
            dimension_semantics=("parallel", "arbitrary"),
            vmem_limit_bytes=_VMEM_LIMIT),
        cost_estimate=cost,
    )(blk_cols, blk_counts, a_bf, t, b.astype(jnp.float32))
    ssum = jnp.sum(stats, axis=0)                    # [8, H]; rows 0/1 valid
    mean = ssum[0] / n_real
    var = jnp.maximum(ssum[1] / n_real - mean * mean, 0.0)   # biased (training BN)
    return y, mean[None, :], var[None, :]


def _bn_act(y, scale, shift, residual):
    m, h = y.shape
    tm = _pick_tile(m, 512)
    add_res = residual is not None
    kern = functools.partial(bn_act_kernel, add_res)
    arrays = [y, scale, shift]
    in_specs = [pl.BlockSpec((tm, h), lambda i: (i, 0)),
                pl.BlockSpec((1, h), lambda i: (0, 0)),
                pl.BlockSpec((1, h), lambda i: (0, 0))]
    if add_res:
        arrays.append(residual)
        in_specs.append(pl.BlockSpec((tm, h), lambda i: (i, 0)))
    return pl.pallas_call(
        kern,
        out_shape=jax.ShapeDtypeStruct((m, h), jnp.bfloat16),
        grid_spec=pltpu.PrefetchScalarGridSpec(
            num_scalar_prefetch=0,
            grid=(m // tm,),
            in_specs=in_specs,
            out_specs=pl.BlockSpec((tm, h), lambda i: (i, 0))),
        compiler_params=pltpu.CompilerParams(
            dimension_semantics=("parallel",),
            vmem_limit_bytes=_VMEM_LIMIT),
    )(*arrays)


def _bn_act_pool(y, scale, shift, residual, p):
    # Final-block epilogue: BN + (residual) + ReLU fused with mean-pooling
    # partial sums; the full activation is never written back to HBM.
    m, h = y.shape
    b_pad = p.shape[0]
    tm = _pick_tile(m, 512)
    add_res = residual is not None
    kern = functools.partial(bn_act_pool_kernel, add_res)
    arrays = [y, scale, shift]
    in_specs = [pl.BlockSpec((tm, h), lambda i: (i, 0)),
                pl.BlockSpec((1, h), lambda i: (0, 0)),
                pl.BlockSpec((1, h), lambda i: (0, 0))]
    if add_res:
        arrays.append(residual)
        in_specs.append(pl.BlockSpec((tm, h), lambda i: (i, 0)))
    arrays.append(p)
    in_specs.append(pl.BlockSpec((b_pad, tm), lambda i: (0, i)))
    return pl.pallas_call(
        kern,
        out_shape=jax.ShapeDtypeStruct((b_pad, h), jnp.float32),
        grid_spec=pltpu.PrefetchScalarGridSpec(
            num_scalar_prefetch=0,
            grid=(m // tm,),
            in_specs=in_specs,
            out_specs=pl.BlockSpec((b_pad, h), lambda i: (0, 0)),
            scratch_shapes=[pltpu.VMEM((b_pad, h), jnp.float32)]),
        compiler_params=pltpu.CompilerParams(
            dimension_semantics=("arbitrary",),     # pooled output resident
            vmem_limit_bytes=_VMEM_LIMIT),
    )(*arrays)


def mlp_head(pooled, linears, out_dim, num_graphs):
    nl = len(linears)
    kern = functools.partial(mlp_kernel, nl)
    arrays = [pooled.astype(jnp.float32)]
    in_specs = [_VMEM]
    for lin in linears:
        arrays.append(lin["w"].astype(jnp.bfloat16))
        arrays.append(lin["b"].astype(jnp.float32))
        in_specs += [_VMEM, _VMEM]
    b_pad = pooled.shape[0]
    last_pad = linears[-1]["w"].shape[1]
    out = pl.pallas_call(
        kern,
        out_shape=jax.ShapeDtypeStruct((b_pad, last_pad), jnp.float32),
        in_specs=in_specs,
        out_specs=_VMEM,
    )(*arrays)
    return out[:num_graphs, :out_dim]


def gcn_block(a_bf, x_bf, blk, n_real, bs, pool_p=None):
    # conv1: A_norm @ (X @ W1) + b1 -> BN1 stats
    t1 = _xw(x_bf, blk["w1"])
    y1, m1, v1 = _propagate(a_bf, t1, blk["b1"], n_real, *bs)
    scale1 = blk["g1"] * jax.lax.rsqrt(v1 + EPS)
    shift1 = blk["be1"] - m1 * scale1

    # conv2: BN1+ReLU fused into the transform matmul prologue
    t2 = _xw(y1, blk["w2"], scale=scale1, shift=shift1)
    y2, m2, v2 = _propagate(a_bf, t2, blk["b2"], n_real, *bs)
    scale2 = blk["g2"] * jax.lax.rsqrt(v2 + EPS)
    shift2 = blk["be2"] - m2 * scale2

    residual = x_bf if blk["residual"] else None
    if pool_p is None:
        return _bn_act(y2, scale2, shift2, residual)
    return _bn_act_pool(y2, scale2, shift2, residual, pool_p)


def build_pool_matrix(batch, num_graphs, n_real, np_):
    b_pad = _round_up(num_graphs, SUB)
    onehot = (batch[None, :] == jnp.arange(num_graphs)[:, None]).astype(jnp.float32)
    p = jnp.zeros((b_pad, np_), jnp.float32).at[:num_graphs, :n_real].set(onehot)
    counts = jnp.maximum(onehot.sum(axis=1), 1.0)
    counts_pad = jnp.ones((b_pad,), jnp.float32).at[:num_graphs].set(counts)
    return p, counts_pad


# ---------------------------- params & forward ------------------------------

def init_params(key, num_input_features, hidden_dims, linear_dims):
    params = {"convs": [], "linears": [], "out_dim": linear_dims[-1]}
    key, k = jax.random.split(key)
    # GaussianKernelDistance.inverse_sigma = rand(1)*0.02 + 0.99
    params["inv_sigma"] = jax.random.uniform(k, (1,), jnp.float32) * 0.02 + 0.99

    def pad_mat(mat, r, c):
        return jnp.zeros((r, c), jnp.float32).at[:mat.shape[0], :mat.shape[1]].set(mat)

    in_dim = num_input_features
    for h in hidden_dims:
        key, k1, k2 = jax.random.split(key, 3)
        ip, hp = _round_up(in_dim, LANE), _round_up(h, LANE)
        w1 = jax.random.normal(k1, (in_dim, h), jnp.float32) / jnp.sqrt(in_dim)
        w2 = jax.random.normal(k2, (h, h), jnp.float32) / jnp.sqrt(h)
        params["convs"].append({
            "w1": pad_mat(w1, ip, hp),
            "b1": jnp.zeros((1, hp), jnp.float32),
            "g1": jnp.ones((1, hp), jnp.float32),
            "be1": jnp.zeros((1, hp), jnp.float32),
            "w2": pad_mat(w2, hp, hp),
            "b2": jnp.zeros((1, hp), jnp.float32),
            "g2": jnp.ones((1, hp), jnp.float32),
            "be2": jnp.zeros((1, hp), jnp.float32),
            "residual": in_dim == h,
        })
        in_dim = h
    for h in linear_dims:
        key, k1, k2 = jax.random.split(key, 3)
        ip, hp = _round_up(in_dim, LANE), _round_up(h, LANE)
        w = jax.random.normal(k1, (in_dim, h), jnp.float32) / jnp.sqrt(in_dim)
        b = jax.random.normal(k2, (1, h), jnp.float32) * 0.01
        params["linears"].append({"w": pad_mat(w, ip, hp), "b": pad_mat(b, 1, hp)})
        in_dim = h
    return params


def sparse_gcn_forward(params, x, edge_index, pos, batch, num_graphs):
    n, f = x.shape
    np_ = _round_up(n, LANE)
    f_pad = _round_up(f, LANE)

    ew = gaussian_edge_weights(params["inv_sigma"], edge_index, pos)
    a = normalized_adjacency(edge_index, ew, n)
    a_pad = jnp.zeros((np_, np_), jnp.float32).at[:n, :n].set(a)
    a_bf = a_pad.astype(jnp.bfloat16)      # bf16 MXU operand; f32 accumulation

    # Block-sparse structure of A (shared by every propagation in the model).
    tm = _pick_tile(np_, 512)
    tk = _pick_tile(np_, 512)
    cols, counts, max_blocks = _block_structure(a_pad, tm, tk)
    bs = (cols, counts, max_blocks, tm, tk)

    h = jnp.zeros((np_, f_pad), jnp.float32).at[:n, :f].set(x).astype(jnp.bfloat16)
    p, gcounts = build_pool_matrix(batch, num_graphs, n, np_)

    nconvs = len(params["convs"])
    pooled = None
    for bi, blk in enumerate(params["convs"]):
        if bi < nconvs - 1:
            h = gcn_block(a_bf, h, blk, n, bs)
        else:
            pooled = gcn_block(a_bf, h, blk, n, bs, pool_p=p)

    pooled = pooled / gcounts[:, None]      # scatter_mean division (tiny glue)
    return mlp_head(pooled, params["linears"], params["out_dim"], num_graphs)


# --------------------------------- main --------------------------------------

if __name__ == "__main__":
    key = jax.random.PRNGKey(0)
    num_nodes, num_features = 16, 8
    nodes_per_graph, num_graphs = 8, 2
    hidden_dims = [8, 16]          # first block has residual (8 == 8)
    linear_dims = [16, 4]

    kx, kp, kparams = jax.random.split(key, 3)
    x = jax.random.normal(kx, (num_nodes, num_features), jnp.float32)
    pos = jax.random.normal(kp, (num_nodes, 3), jnp.float32)

    # two ring graphs of 8 nodes each, both edge directions -> 32 edges
    edges = []
    for g in range(num_graphs):
        off = g * nodes_per_graph
        for i in range(nodes_per_graph):
            a, b = off + i, off + (i + 1) % nodes_per_graph
            edges.append((a, b))
            edges.append((b, a))
    edge_index = jnp.array(edges, dtype=jnp.int32).T       # [2, num_edges]
    batch = jnp.repeat(jnp.arange(num_graphs, dtype=jnp.int32), nodes_per_graph)

    params = init_params(kparams, num_features, hidden_dims, linear_dims)
    out = sparse_gcn_forward(params, x, edge_index, pos, batch, num_graphs)
    out = jax.block_until_ready(out)
    assert out.shape == (num_graphs, linear_dims[-1])
    assert bool(jnp.all(jnp.isfinite(out)))
    print("KERNEL_OK")
</pallas_src>

<mosaic_0001>
module attributes {stable_mosaic.version = 11 : i64} {
  func.func @gaussian_edge_kernel(%arg0: memref<1x1xf32, #tpu.memory_space<smem>>, %arg1: memref<8x128xf32, #tpu.memory_space<vmem>>, %arg2: memref<1x128xf32, #tpu.memory_space<vmem>>) attributes {dimension_semantics = [], scalar_prefetch = 0 : i64, scratch_operands = 0 : i64, tpu.core_type = #tpu.core_type<tc>} {
    %c0 = arith.constant 0 : index
    %c0_0 = arith.constant 0 : index
    %0 = vector.load %arg1[%c0, %c0_0] : memref<8x128xf32, #tpu.memory_space<vmem>>, vector<8x128xf32>
    %1 = arith.mulf %0, %0 : vector<8x128xf32>
    %cst = arith.constant dense<0.000000e+00> : vector<128xf32>
    %2 = vector.multi_reduction <add>, %1, %cst [0] : vector<8x128xf32> to vector<128xf32>
    %3 = vector.shape_cast %2 : vector<128xf32> to vector<1x128xf32>
    %c0_1 = arith.constant 0 : index
    %c0_2 = arith.constant 0 : index
    %4 = memref.load %arg0[%c0_1, %c0_2] : memref<1x1xf32, #tpu.memory_space<smem>>
    %cst_3 = arith.constant 0.000000e+00 : f32
    %5 = arith.subf %cst_3, %4 : f32
    %6 = vector.broadcast %5 : f32 to vector<1x128xf32>
    %7 = arith.mulf %6, %3 : vector<1x128xf32>
    %8 = math.exp %7 : vector<1x128xf32>
    %c0_4 = arith.constant 0 : index
    %c0_5 = arith.constant 0 : index
    %9 = vector.load %arg2[%c0_4, %c0_5] : memref<1x128xf32, #tpu.memory_space<vmem>>, vector<1x128xf32>
    tpu.vector_store %arg2[%c0_4, %c0_5], %8 {strides = array<i32>} : memref<1x128xf32, #tpu.memory_space<vmem>>, vector<1x128xf32>,
    return
  }
}

</mosaic_0001>

<llo_original>
// kernel: tpu_custom_call.1
$region0: #{tpu_custom_call.1}
  #allocation0 [shape = 'u32[]', space=smem, size = 0x4, offset = 0x4, fixed_abs, tag = 'smem constant byte address 0x4 - core index']
  #allocation1 [shape = 'u32[144,128]{1,0:T(1,128)}', space=vmem, size = 0x12000, scoped, tag = 'internal scratch']
  #allocation2 [shape = 'f32[1,1]{1,0:T(1,128)S(6)}', space=smem, size = 0x200, scoped, tag = 'scoped memory for tpu_custom_call.1']
  %s0 = inlined_call_operand.<no memory space> [shape: f32[1,1], index: 0, kind: input, shape index: {}]
  %s1 = inlined_call_operand.hbm [shape: f32[8,128], index: 1, kind: input, shape index: {}]
  %s2 = inlined_call_operand.hbm [shape: f32[1,128], index: 2, kind: output, shape index: {}]
  %s3 = sld [smem:[#allocation0]]
  $region22: #{tpu_custom_call.1} parent=0
    _
  %s5 = ssub.s32 1, %s3
  %s6 = scalar_select 0, %s5, %s3
  %7 = sst [smem:[#allocation2]] %s0
  $region1: #{tpu_custom_call.1} parent=0
    #allocation3 [shape = 'u8[4096]{0}', space=vmem, size = 0x1000, scoped, tag = 'input window, operand 1, single buffered']
    #allocation4 [shape = 's32[1]{0}', space=sflag, size = 0x4, scoped, tag = 'scoped memory for tpu_custom_call.1']
    #allocation5 [shape = 's32[1]{0}', space=sflag, size = 0x4, scoped, tag = 'scoped memory for tpu_custom_call.1']
    #allocation6 [shape = 'u8[512]{0}', space=vmem, size = 0x400, scoped, tag = 'output window, operand 0, single buffered']
    %8 = vsyncpa [#allocation4], 0
    %9 = vsyncpa [#allocation5], 0
    // Predicated region
    $region2: #{tpu_custom_call.1} parent=1 // pred_check
      _
    $region3: #{tpu_custom_call.1} parent=1 // pred_check_branch
      %11 = sbr.rel (0) target = $region5
    $region4: #{tpu_custom_call.1} parent=1 // pred_region
      _
    $region5: #{tpu_custom_call.1} parent=1 // pred_fallthru
      _
    // Predicated region
    $region6: #{tpu_custom_call.1} parent=1 // pred_check
      _
    $region7: #{tpu_custom_call.1} parent=1 // pred_check_branch
      %13 = sbr.rel (0) target = $region9
    $region8: #{tpu_custom_call.1} parent=1 // pred_region
      %s15 = ssub.s32 128, 128
      %16 = vsyncadd [#allocation4], %s15
      %s18 = sshll.u32 [#allocation3], 4
      %s19 = int_to_ptr.vmem [resolvable:$true] %s18
      %21 = dma.hbm_to_vmem [thread:$0]  %s1, 128, %s19, [#allocation4]
    $region9: #{tpu_custom_call.1} parent=1 // pred_fallthru
      _
    // Predicated region
    $region10: #{tpu_custom_call.1} parent=1 // pred_check
      _
    $region11: #{tpu_custom_call.1} parent=1 // pred_check_branch
      %23 = sbr.rel (0) target = $region13
    $region12: #{tpu_custom_call.1} parent=1 // pred_region
      %24 = dma.done [#allocation4], 128
    $region13: #{tpu_custom_call.1} parent=1 // pred_fallthru
      _
    %v25 = vld [vmem:[#allocation3] sm:$0xff]
    %v26 = vmul.f32 %v25, %v25
    %v27 = vrot.slane %v26, 4
    %v28 = vadd.f32 %v26, %v27
    %v29 = vrot.slane %v28, 2
    %v30 = vadd.f32 %v28, %v29
    %v31 = vrot.slane %v30, 1
    %v32 = vadd.f32 %v30, %v31
    %s33 = sld [smem:[#allocation2]]
    %s34 = ssub.f32 0.0, %s33
    %v35 = vstv %s34
    %v36 = vmul.f32 %v35, %v32
    %v37 = vmul.f32 %v36, 1.442695
    %v38 = vpow.pop %v37
    %39 = vst [vmem:[#allocation6] sm:$0x1] %v38
    // Predicated region
    $region14: #{tpu_custom_call.1} parent=1 // pred_check
      _
    $region15: #{tpu_custom_call.1} parent=1 // pred_check_branch
      %41 = sbr.rel (0) target = $region17
    $region16: #{tpu_custom_call.1} parent=1 // pred_region
      %s43 = ssub.s32 16, 16
      %44 = vsyncadd [#allocation5], %s43
      %s46 = sshll.u32 [#allocation6], 4
      %s47 = int_to_ptr.vmem [resolvable:$true] %s46
      %49 = dma.vmem_to_hbm [thread:$0]  %s47, 16, %s2, [#allocation5]
    $region17: #{tpu_custom_call.1} parent=1 // pred_fallthru
      _
    // Predicated region
    $region18: #{tpu_custom_call.1} parent=1 // pred_check
      _
    $region19: #{tpu_custom_call.1} parent=1 // pred_check_branch
      %51 = sbr.rel (0) target = $region21
    $region20: #{tpu_custom_call.1} parent=1 // pred_region
      %52 = dma.done [#allocation5], 16
    $region21: #{tpu_custom_call.1} parent=1 // pred_fallthru
      _
    %53 = vsyncpa [#allocation4], 1
    %54 = vsyncpa [#allocation5], 1

</llo_original>
